<compile_context>
chip_gen: v5e
topology: v5e:2x2
jax: 0.10.0
libtpu: 0.0.40
codegen_flags: <defaults>
</compile_context>

<pallas_src>
import functools

import jax
import jax.numpy as jnp
from jax.experimental import pallas as pl
from jax.experimental.pallas import tpu as pltpu

_LANES = 128


def _round_up(x, m):
    return ((x + m - 1) // m) * m


def _loss_kernel(pred_ref, actual_ref, ps_ref, y_ref,
                 term_acc_ref, y_acc_ref,
                 *, phi, y_pow, loss_ratio):
    """Elementwise hot path + running accumulation.

    Grid = (num_chunks [parallel], steps [arbitrary]).  The two outputs are
    per-chunk accumulators: their block index only depends on the parallel
    axis, so they stay resident in VMEM across the inner reduction axis.
    """
    step = pl.program_id(1)

    @pl.when(step == 0)
    def _init():
        term_acc_ref[...] = jnp.zeros_like(term_acc_ref)
        y_acc_ref[...] = jnp.zeros_like(y_acc_ref)

    loss = jnp.abs(pred_ref[...] - actual_ref[...])

    # I_phi = max(loss/phi, 1) (detached)  =>  loss / I_phi == min(loss, phi)
    if loss_ratio == 0.0:
        blended = loss
    elif loss_ratio == 1.0:
        blended = jnp.minimum(loss, jnp.float32(phi))
    else:
        i_wg = jnp.minimum(loss, jnp.float32(phi))
        blended = (1.0 - loss_ratio) * loss + loss_ratio * i_wg

    y = y_ref[...]
    y_p = y if y_pow == 1 else y ** y_pow

    # Exactly one divide per element; the global mean(y)^(-y_pow) scale is
    # applied outside the kernel.
    term_acc_ref[...] += (blended * y_p) / ps_ref[...]
    y_acc_ref[...] += y


def my_loss_detached_I_dyn1(pred, actual, ps, y, *,
                            y_pow=1, phi=0.5, loss_ratio=0.0,
                            block_rows=1024, num_chunks=2):
    """Forward loss. `phi`, `y_pow`, `loss_ratio` must be Python scalars."""
    assert pred.shape == actual.shape == ps.shape == y.shape
    n = int(pred.size)

    # Lane-dense layout: flatten, pad, reshape to (rows, 128).
    pred = jnp.asarray(pred, jnp.float32).reshape(-1)
    actual = jnp.asarray(actual, jnp.float32).reshape(-1)
    ps = jnp.asarray(ps, jnp.float32).reshape(-1)
    y = jnp.asarray(y, jnp.float32).reshape(-1)

    nc = int(num_chunks)
    rows_needed = -(-n // _LANES)
    rows_per_chunk = -(-rows_needed // nc)
    tb = min(int(block_rows), _round_up(max(rows_per_chunk, 8), 8))
    steps = -(-rows_per_chunk // tb)
    rows_total = nc * tb * steps
    n_pad = rows_total * _LANES

    pad = n_pad - n
    if pad:
        pred = jnp.pad(pred, (0, pad))
        actual = jnp.pad(actual, (0, pad))
        y = jnp.pad(y, (0, pad))
        ps = jnp.pad(ps, (0, pad), constant_values=1.0)  # avoid 0/0 in padding

    shape2d = (rows_total, _LANES)
    pred = pred.reshape(shape2d)
    actual = actual.reshape(shape2d)
    ps = ps.reshape(shape2d)
    y = y.reshape(shape2d)

    kernel = functools.partial(_loss_kernel, phi=float(phi), y_pow=y_pow,
                               loss_ratio=float(loss_ratio))

    def in_map(c, i, _steps=steps):
        return (c * _steps + i, 0)

    in_spec = pl.BlockSpec((tb, _LANES), in_map)
    acc_spec = pl.BlockSpec((None, tb, _LANES), lambda c, i: (c, 0, 0))

    term_acc, y_acc = pl.pallas_call(
        kernel,
        out_shape=(jax.ShapeDtypeStruct((nc, tb, _LANES), jnp.float32),
                   jax.ShapeDtypeStruct((nc, tb, _LANES), jnp.float32)),
        grid=(nc, steps),
        in_specs=[in_spec, in_spec, in_spec, in_spec],
        out_specs=(acc_spec, acc_spec),
        compiler_params=pltpu.CompilerParams(
            dimension_semantics=("parallel", "arbitrary")),
    )(pred, actual, ps, y)

    # Tiny final combine (a few KiB) in plain JAX: cross-chunk reduction and
    # the factored-out mean(y)^(-y_pow) scale.
    sum_term = jnp.sum(term_acc)
    sum_y = jnp.sum(y_acc)
    mean_y = sum_y / jnp.float32(n)
    return sum_term / (mean_y ** y_pow)


def _reference(pred, actual, ps, y, *, y_pow=1, phi=0.5, loss_ratio=0.0):
    """Direct JAX transcription of the torch forward (for checking)."""
    loss = jnp.abs(pred - actual)
    ratio = loss / phi
    i_phi = jnp.where(ratio > 1.0, ratio, jnp.ones_like(ratio))
    i_wg = loss / i_phi
    y_n = (y / jnp.mean(y)) ** y_pow
    w = y_n / ps
    return (1.0 - loss_ratio) * jnp.sum(loss * w) + loss_ratio * jnp.sum(i_wg * w)


if __name__ == "__main__":
    key = jax.random.PRNGKey(0)
    k1, k2, k3, k4 = jax.random.split(key, 4)

    def make_inputs(shape):
        pred = jax.random.normal(k1, shape, dtype=jnp.float32)
        actual = jax.random.normal(k2, shape, dtype=jnp.float32)
        ps = jax.random.uniform(k3, shape, dtype=jnp.float32,
                                minval=0.1, maxval=0.9)
        yv = jax.random.uniform(k4, shape, dtype=jnp.float32,
                                minval=0.5, maxval=1.5)
        return pred, actual, ps, yv

    configs = [
        ((8, 128), dict(y_pow=1, phi=0.5, loss_ratio=0.0)),   # defaults
        ((16, 256), dict(y_pow=2, phi=0.5, loss_ratio=0.5)),  # blended path
        ((5, 37), dict(y_pow=1, phi=0.25, loss_ratio=1.0)),   # ragged + pad
    ]

    for shape, kw in configs:
        pred, actual, ps, yv = make_inputs(shape)
        out = my_loss_detached_I_dyn1(pred, actual, ps, yv, **kw)
        out = jax.block_until_ready(out)
        ref = _reference(pred, actual, ps, yv, **kw)
        assert jnp.allclose(out, ref, rtol=1e-4, atol=1e-4), (shape, kw, out, ref)

    print("KERNEL_OK")
</pallas_src>

<mosaic_0001>
module attributes {stable_mosaic.version = 11 : i64} {
  func.func @_loss_kernel(%arg0: i32, %arg1: i32, %arg2: memref<8x128xf32, #tpu.memory_space<vmem>>, %arg3: memref<8x128xf32, #tpu.memory_space<vmem>>, %arg4: memref<8x128xf32, #tpu.memory_space<vmem>>, %arg5: memref<8x128xf32, #tpu.memory_space<vmem>>, %arg6: memref<1x8x128xf32, #tpu.memory_space<vmem>>, %arg7: memref<1x8x128xf32, #tpu.memory_space<vmem>>) attributes {dimension_semantics = [#tpu.dimension_semantics<parallel>, #tpu.dimension_semantics<arbitrary>], iteration_bounds = array<i64: 2, 1>, scalar_prefetch = 0 : i64, scratch_operands = 0 : i64, tpu.core_type = #tpu.core_type<tc>, window_params = [{transform_indices = @transform_0, window_bounds = array<i64: 8, 128>}, {transform_indices = @transform_1, window_bounds = array<i64: 8, 128>}, {transform_indices = @transform_2, window_bounds = array<i64: 8, 128>}, {transform_indices = @transform_3, window_bounds = array<i64: 8, 128>}, {transform_indices = @transform_4, window_bounds = array<i64: 1, 8, 128>}, {transform_indices = @transform_5, window_bounds = array<i64: 1, 8, 128>}]} {
    %c0_i32 = arith.constant 0 : i32
    %0 = arith.cmpi eq, %arg1, %c0_i32 : i32
    %1 = arith.extui %0 : i1 to i32
    %c0_i32_0 = arith.constant 0 : i32
    %2 = arith.cmpi ne, %1, %c0_i32_0 : i32
    scf.if %2 {
      %cst = arith.constant 0.000000e+00 : f32
      %23 = vector.broadcast %cst : f32 to vector<8x128xf32>
      %c0_20 = arith.constant 0 : index
      %c0_21 = arith.constant 0 : index
      %c0_22 = arith.constant 0 : index
      %24 = vector.load %arg6[%c0_20, %c0_21, %c0_22] : memref<1x8x128xf32, #tpu.memory_space<vmem>>, vector<1x8x128xf32>
      %25 = vector.shape_cast %24 : vector<1x8x128xf32> to vector<8x128xf32>
      %26 = vector.shape_cast %23 : vector<8x128xf32> to vector<1x8x128xf32>
      tpu.vector_store %arg6[%c0_20, %c0_21, %c0_22], %26 {strides = array<i32>} : memref<1x8x128xf32, #tpu.memory_space<vmem>>, vector<1x8x128xf32>,
      %cst_23 = arith.constant 0.000000e+00 : f32
      %27 = vector.broadcast %cst_23 : f32 to vector<8x128xf32>
      %c0_24 = arith.constant 0 : index
      %c0_25 = arith.constant 0 : index
      %c0_26 = arith.constant 0 : index
      %28 = vector.load %arg7[%c0_24, %c0_25, %c0_26] : memref<1x8x128xf32, #tpu.memory_space<vmem>>, vector<1x8x128xf32>
      %29 = vector.shape_cast %28 : vector<1x8x128xf32> to vector<8x128xf32>
      %30 = vector.shape_cast %27 : vector<8x128xf32> to vector<1x8x128xf32>
      tpu.vector_store %arg7[%c0_24, %c0_25, %c0_26], %30 {strides = array<i32>} : memref<1x8x128xf32, #tpu.memory_space<vmem>>, vector<1x8x128xf32>,
    } else {
    }
    %c0 = arith.constant 0 : index
    %c0_1 = arith.constant 0 : index
    %3 = vector.load %arg2[%c0, %c0_1] : memref<8x128xf32, #tpu.memory_space<vmem>>, vector<8x128xf32>
    %c0_2 = arith.constant 0 : index
    %c0_3 = arith.constant 0 : index
    %4 = vector.load %arg3[%c0_2, %c0_3] : memref<8x128xf32, #tpu.memory_space<vmem>>, vector<8x128xf32>
    %5 = arith.subf %3, %4 : vector<8x128xf32>
    %6 = math.absf %5 : vector<8x128xf32>
    %c0_4 = arith.constant 0 : index
    %c0_5 = arith.constant 0 : index
    %7 = vector.load %arg5[%c0_4, %c0_5] : memref<8x128xf32, #tpu.memory_space<vmem>>, vector<8x128xf32>
    %c0_6 = arith.constant 0 : index
    %c0_7 = arith.constant 0 : index
    %c0_8 = arith.constant 0 : index
    %8 = vector.load %arg6[%c0_6, %c0_7, %c0_8] : memref<1x8x128xf32, #tpu.memory_space<vmem>>, vector<1x8x128xf32>
    %9 = vector.shape_cast %8 : vector<1x8x128xf32> to vector<8x128xf32>
    %10 = arith.mulf %6, %7 : vector<8x128xf32>
    %c0_9 = arith.constant 0 : index
    %c0_10 = arith.constant 0 : index
    %11 = vector.load %arg4[%c0_9, %c0_10] : memref<8x128xf32, #tpu.memory_space<vmem>>, vector<8x128xf32>
    %12 = arith.divf %10, %11 : vector<8x128xf32>
    %13 = arith.addf %9, %12 : vector<8x128xf32>
    %c0_11 = arith.constant 0 : index
    %c0_12 = arith.constant 0 : index
    %c0_13 = arith.constant 0 : index
    %14 = vector.load %arg6[%c0_11, %c0_12, %c0_13] : memref<1x8x128xf32, #tpu.memory_space<vmem>>, vector<1x8x128xf32>
    %15 = vector.shape_cast %14 : vector<1x8x128xf32> to vector<8x128xf32>
    %16 = vector.shape_cast %13 : vector<8x128xf32> to vector<1x8x128xf32>
    tpu.vector_store %arg6[%c0_11, %c0_12, %c0_13], %16 {strides = array<i32>} : memref<1x8x128xf32, #tpu.memory_space<vmem>>, vector<1x8x128xf32>,
    %c0_14 = arith.constant 0 : index
    %c0_15 = arith.constant 0 : index
    %c0_16 = arith.constant 0 : index
    %17 = vector.load %arg7[%c0_14, %c0_15, %c0_16] : memref<1x8x128xf32, #tpu.memory_space<vmem>>, vector<1x8x128xf32>
    %18 = vector.shape_cast %17 : vector<1x8x128xf32> to vector<8x128xf32>
    %19 = arith.addf %18, %7 : vector<8x128xf32>
    %c0_17 = arith.constant 0 : index
    %c0_18 = arith.constant 0 : index
    %c0_19 = arith.constant 0 : index
    %20 = vector.load %arg7[%c0_17, %c0_18, %c0_19] : memref<1x8x128xf32, #tpu.memory_space<vmem>>, vector<1x8x128xf32>
    %21 = vector.shape_cast %20 : vector<1x8x128xf32> to vector<8x128xf32>
    %22 = vector.shape_cast %19 : vector<8x128xf32> to vector<1x8x128xf32>
    tpu.vector_store %arg7[%c0_17, %c0_18, %c0_19], %22 {strides = array<i32>} : memref<1x8x128xf32, #tpu.memory_space<vmem>>, vector<1x8x128xf32>,
    return
  }
  func.func @transform_0(%arg0: i32, %arg1: i32) -> (i32, i32) {
    %c1_i32 = arith.constant 1 : i32
    %0 = arith.muli %arg0, %c1_i32 : i32
    %1 = arith.addi %0, %arg1 : i32
    %c0_i32 = arith.constant 0 : i32
    %c0_i32_0 = arith.constant 0 : i32
    return %1, %c0_i32 : i32, i32
  }
  func.func @transform_1(%arg0: i32, %arg1: i32) -> (i32, i32) {
    %c1_i32 = arith.constant 1 : i32
    %0 = arith.muli %arg0, %c1_i32 : i32
    %1 = arith.addi %0, %arg1 : i32
    %c0_i32 = arith.constant 0 : i32
    %c0_i32_0 = arith.constant 0 : i32
    return %1, %c0_i32 : i32, i32
  }
  func.func @transform_2(%arg0: i32, %arg1: i32) -> (i32, i32) {
    %c1_i32 = arith.constant 1 : i32
    %0 = arith.muli %arg0, %c1_i32 : i32
    %1 = arith.addi %0, %arg1 : i32
    %c0_i32 = arith.constant 0 : i32
    %c0_i32_0 = arith.constant 0 : i32
    return %1, %c0_i32 : i32, i32
  }
  func.func @transform_3(%arg0: i32, %arg1: i32) -> (i32, i32) {
    %c1_i32 = arith.constant 1 : i32
    %0 = arith.muli %arg0, %c1_i32 : i32
    %1 = arith.addi %0, %arg1 : i32
    %c0_i32 = arith.constant 0 : i32
    %c0_i32_0 = arith.constant 0 : i32
    return %1, %c0_i32 : i32, i32
  }
  func.func @transform_4(%arg0: i32, %arg1: i32) -> (i32, i32, i32) {
    %c0_i32 = arith.constant 0 : i32
    %c0_i32_0 = arith.constant 0 : i32
    %c0_i32_1 = arith.constant 0 : i32
    return %arg0, %c0_i32, %c0_i32_0 : i32, i32, i32
  }
  func.func @transform_5(%arg0: i32, %arg1: i32) -> (i32, i32, i32) {
    %c0_i32 = arith.constant 0 : i32
    %c0_i32_0 = arith.constant 0 : i32
    %c0_i32_1 = arith.constant 0 : i32
    return %arg0, %c0_i32, %c0_i32_0 : i32, i32, i32
  }
}

</mosaic_0001>

<llo_original>
// kernel: tpu_custom_call.1
$region0: #{tpu_custom_call.1}
  #allocation0 [shape = 'u32[]', space=smem, size = 0x4, offset = 0x4, fixed_abs, tag = 'smem constant byte address 0x4 - core index']
  #allocation1 [shape = 'u32[72,128]{1,0:T(1,128)}', space=vmem, size = 0x9000, scoped, tag = 'internal scratch']
  %s0 = inlined_call_operand.hbm [shape: f32[16,128], index: 0, kind: input, shape index: {}]
  %s1 = inlined_call_operand.hbm [shape: f32[16,128], index: 1, kind: input, shape index: {}]
  %s2 = inlined_call_operand.hbm [shape: f32[16,128], index: 2, kind: input, shape index: {}]
  %s3 = inlined_call_operand.hbm [shape: f32[16,128], index: 3, kind: input, shape index: {}]
  %s4 = inlined_call_operand.hbm [shape: f32[2,8,128], index: 4, kind: output, shape index: {0}]
  %s5 = inlined_call_operand.hbm [shape: f32[2,8,128], index: 5, kind: output, shape index: {1}]
  %6 = xla_tuple %s4, %s5
  %s7 = sld [smem:[#allocation0]]
  $region77: #{tpu_custom_call.1} parent=0
    _
  %s9 = ssub.s32 1, %s7
  %s10 = scalar_select 0, %s9, %s7
  $region1: #{tpu_custom_call.1} parent=0
    #allocation2 [shape = 'u8[8192]{0}', space=vmem, size = 0x2000, scoped, tag = 'input window, operand 0']
    #allocation3 [shape = 's32[2]{0}', space=sflag, size = 0x8, scoped, tag = 'scoped memory for tpu_custom_call.1']
    #allocation4 [shape = 's32[2]{0}', space=sflag, size = 0x8, scoped, tag = 'scoped memory for tpu_custom_call.1']
    #allocation5 [shape = 'u8[8192]{0}', space=vmem, size = 0x2000, scoped, tag = 'input window, operand 1']
    #allocation6 [shape = 's32[2]{0}', space=sflag, size = 0x8, scoped, tag = 'scoped memory for tpu_custom_call.1']
    #allocation7 [shape = 'u8[8192]{0}', space=vmem, size = 0x2000, scoped, tag = 'input window, operand 2']
    #allocation8 [shape = 'u8[8192]{0}', space=vmem, size = 0x2000, scoped, tag = 'input window, operand 3']
    #allocation9 [shape = 's32[2]{0}', space=sflag, size = 0x8, scoped, tag = 'scoped memory for tpu_custom_call.1']
    #allocation10 [shape = 'u8[8192]{0}', space=vmem, size = 0x2000, scoped, tag = 'output window, operand 0']
    #allocation11 [shape = 'u8[8192]{0}', space=vmem, size = 0x2000, scoped, tag = 'output window, operand 1']
    #allocation12 [shape = 's32[2]{0}', space=sflag, size = 0x8, scoped, tag = 'scoped memory for tpu_custom_call.1']
    %11 = vsyncpa [#allocation3], 0
    %s12 = scalar_lea.sflag [#allocation3], 1
    %13 = vsyncpa %s12, 0
    %14 = vsyncpa [#allocation6], 0
    %s15 = scalar_lea.sflag [#allocation6], 1
    %16 = vsyncpa %s15, 0
    %17 = vsyncpa [#allocation9], 0
    %s18 = scalar_lea.sflag [#allocation9], 1
    %19 = vsyncpa %s18, 0
    %20 = vsyncpa [#allocation4], 0
    %s21 = scalar_lea.sflag [#allocation4], 1
    %22 = vsyncpa %s21, 0
    %23 = vsyncpa [#allocation12], 0
    %s24 = scalar_lea.sflag [#allocation12], 1
    %25 = vsyncpa %s24, 0
    loop: start=0, step=1, limit=4
    $region2: #{tpu_custom_call.1} parent=1 // loop_pre_header
      _
    $region3: #{tpu_custom_call.1} parent=1 // loop_header
      %s27 = sphi 0, %s31
      %p28 = scmp.ge.s32.totalorder %s27, 4
      %s34 = sphi 0, %s46
      %s35 = sphi 0, %s42
      %s36 = sphi 0, %s34
      %s37 = sphi 0, %s35
      %s38 = sphi 0, %s36
      %s39 = sphi 0, %s37
      %s51 = sphi 0, %s53
      %s54 = sphi 0, %s51
      %s55 = sphi 0, %s54
      %s71 = sphi 0, %s55
      %s79 = sphi 0, %s81
      %s82 = sphi 0, %s79
      %s83 = sphi 0, %s82
      %s99 = sphi 0, %s83
      %s107 = sphi 0, %s109
      %s110 = sphi 0, %s107
      %s111 = sphi 0, %s110
      %s127 = sphi 0, %s111
      %s135 = sphi 0, %s137
      %s138 = sphi 0, %s135
      %s139 = sphi 0, %s138
      %s155 = sphi 0, %s139
      %s161 = sphi 0, %s163
      %s164 = sphi 0, %s161
      %s165 = sphi 0, %s164
      %s181 = sphi 0, %s165
      %s187 = sphi 0, %s189
      %s190 = sphi 0, %s187
      %s191 = sphi 0, %s190
      %s207 = sphi 0, %s191
    $region4: #{tpu_custom_call.1} parent=1 // loop_header_branch
      %30 = sbr.rel (%p28) target = $region8
    $region5: #{tpu_custom_call.1} parent=1 // loop_body
      %s32 = ssub.s32 %s27, 1
      %s33 = ssub.s32 %s27, 2
      %s40 = sadd.s32 1, %s35
      %p41 = scmp.ge.s32.totalorder %s40, 1
      %s42 = scalar_select %p41, 0, %s40
      %s43 = sadd.s32 1, %s34
      %s44 = scalar_select %p41, %s43, %s34
      %p45 = scmp.ge.s32.totalorder %s44, 2
      %s46 = scalar_select %p45, 0, %s44
      %s47 = sadd.s32 %s34, %s35
      %s48 = sadd.s32 %s46, %s42
      %s49 = ssub.s32 %s47, %s48
      %p50 = scmp.eq.s32.totalorder %s49, 0
      %s52 = sadd.s32 %s51, 1
      %s53 = scalar_select %p50, %s51, %s52
      %p56 = pneg %p50
      %p57 = scmp.eq.s32.totalorder %s27, 1
      %p58 = por %p56, %p57
      %p59 = scmp.ne.s32.totalorder %s51, %s54
      %p60 = scmp.eq.s32.totalorder %s27, 0
      %p61 = por %p59, %p60
      %p62 = scmp.ne.s32.totalorder %s51, %s54
      %p63 = scmp.eq.s32.totalorder %s32, 1
      %p64 = por %p62, %p63
      %p65 = scmp.ne.s32.totalorder %s54, %s55
      %p66 = scmp.eq.s32.totalorder %s32, 0
      %p67 = por %p65, %p66
      %p68 = scmp.ne.s32.totalorder %s54, %s55
      %p69 = scmp.eq.s32.totalorder %s33, 1
      %p70 = por %p68, %p69
      %p72 = scmp.ne.s32.totalorder %s55, %s71
      %p73 = scmp.eq.s32.totalorder %s33, 0
      %p74 = por %p72, %p73
      %s75 = sadd.s32 %s34, %s35
      %s76 = sadd.s32 %s46, %s42
      %s77 = ssub.s32 %s75, %s76
      %p78 = scmp.eq.s32.totalorder %s77, 0
      %s80 = sadd.s32 %s79, 1
      %s81 = scalar_select %p78, %s79, %s80
      %p84 = pneg %p78
      %p85 = scmp.eq.s32.totalorder %s27, 1
      %p86 = por %p84, %p85
      %p87 = scmp.ne.s32.totalorder %s79, %s82
      %p88 = scmp.eq.s32.totalorder %s27, 0
      %p89 = por %p87, %p88
      %p90 = scmp.ne.s32.totalorder %s79, %s82
      %p91 = scmp.eq.s32.totalorder %s32, 1
      %p92 = por %p90, %p91
      %p93 = scmp.ne.s32.totalorder %s82, %s83
      %p94 = scmp.eq.s32.totalorder %s32, 0
      %p95 = por %p93, %p94
      %p96 = scmp.ne.s32.totalorder %s82, %s83
      %p97 = scmp.eq.s32.totalorder %s33, 1
      %p98 = por %p96, %p97
      %p100 = scmp.ne.s32.totalorder %s83, %s99
      %p101 = scmp.eq.s32.totalorder %s33, 0
      %p102 = por %p100, %p101
      %s103 = sadd.s32 %s34, %s35
      %s104 = sadd.s32 %s46, %s42
      %s105 = ssub.s32 %s103, %s104
      %p106 = scmp.eq.s32.totalorder %s105, 0
      %s108 = sadd.s32 %s107, 1
      %s109 = scalar_select %p106, %s107, %s108
      %p112 = pneg %p106
      %p113 = scmp.eq.s32.totalorder %s27, 1
      %p114 = por %p112, %p113
      %p115 = scmp.ne.s32.totalorder %s107, %s110
      %p116 = scmp.eq.s32.totalorder %s27, 0
      %p117 = por %p115, %p116
      %p118 = scmp.ne.s32.totalorder %s107, %s110
      %p119 = scmp.eq.s32.totalorder %s32, 1
      %p120 = por %p118, %p119
      %p121 = scmp.ne.s32.totalorder %s110, %s111
      %p122 = scmp.eq.s32.totalorder %s32, 0
      %p123 = por %p121, %p122
      %p124 = scmp.ne.s32.totalorder %s110, %s111
      %p125 = scmp.eq.s32.totalorder %s33, 1
      %p126 = por %p124, %p125
      %p128 = scmp.ne.s32.totalorder %s111, %s127
      %p129 = scmp.eq.s32.totalorder %s33, 0
      %p130 = por %p128, %p129
      %s131 = sadd.s32 %s34, %s35
      %s132 = sadd.s32 %s46, %s42
      %s133 = ssub.s32 %s131, %s132
      %p134 = scmp.eq.s32.totalorder %s133, 0
      %s136 = sadd.s32 %s135, 1
      %s137 = scalar_select %p134, %s135, %s136
      %p140 = pneg %p134
      %p141 = scmp.eq.s32.totalorder %s27, 1
      %p142 = por %p140, %p141
      %p143 = scmp.ne.s32.totalorder %s135, %s138
      %p144 = scmp.eq.s32.totalorder %s27, 0
      %p145 = por %p143, %p144
      %p146 = scmp.ne.s32.totalorder %s135, %s138
      %p147 = scmp.eq.s32.totalorder %s32, 1
      %p148 = por %p146, %p147
      %p149 = scmp.ne.s32.totalorder %s138, %s139
      %p150 = scmp.eq.s32.totalorder %s32, 0
      %p151 = por %p149, %p150
      %p152 = scmp.ne.s32.totalorder %s138, %s139
      %p153 = scmp.eq.s32.totalorder %s33, 1
      %p154 = por %p152, %p153
      %p156 = scmp.ne.s32.totalorder %s139, %s155
      %p157 = scmp.eq.s32.totalorder %s33, 0
      %p158 = por %p156, %p157
      %s159 = ssub.s32 %s34, %s46
      %p160 = scmp.eq.s32.totalorder %s159, 0
      %s162 = sadd.s32 %s161, 1
      %s163 = scalar_select %p160, %s161, %s162
      %p166 = pneg %p160
      %p167 = scmp.eq.s32.totalorder %s27, 1
      %p168 = por %p166, %p167
      %p169 = scmp.ne.s32.totalorder %s161, %s164
      %p170 = scmp.eq.s32.totalorder %s27, 0
      %p171 = por %p169, %p170
      %p172 = scmp.ne.s32.totalorder %s161, %s164
      %p173 = scmp.eq.s32.totalorder %s32, 1
      %p174 = por %p172, %p173
      %p175 = scmp.ne.s32.totalorder %s164, %s165
      %p176 = scmp.eq.s32.totalorder %s32, 0
      %p177 = por %p175, %p176
      %p178 = scmp.ne.s32.totalorder %s164, %s165
      %p179 = scmp.eq.s32.totalorder %s33, 1
      %p180 = por %p178, %p179
      %p182 = scmp.ne.s32.totalorder %s165, %s181
      %p183 = scmp.eq.s32.totalorder %s33, 0
      %p184 = por %p182, %p183
      %s185 = ssub.s32 %s34, %s46
      %p186 = scmp.eq.s32.totalorder %s185, 0
      %s188 = sadd.s32 %s187, 1
      %s189 = scalar_select %p186, %s187, %s188
      %p192 = pneg %p186
      %p193 = scmp.eq.s32.totalorder %s27, 1
      %p194 = por %p192, %p193
      %p195 = scmp.ne.s32.totalorder %s187, %s190
      %p196 = scmp.eq.s32.totalorder %s27, 0
      %p197 = por %p195, %p196
      %p198 = scmp.ne.s32.totalorder %s187, %s190
      %p199 = scmp.eq.s32.totalorder %s32, 1
      %p200 = por %p198, %p199
      %p201 = scmp.ne.s32.totalorder %s190, %s191
      %p202 = scmp.eq.s32.totalorder %s32, 0
      %p203 = por %p201, %p202
      %p204 = scmp.ne.s32.totalorder %s190, %s191
      %p205 = scmp.eq.s32.totalorder %s33, 1
      %p206 = por %p204, %p205
      %p208 = scmp.ne.s32.totalorder %s191, %s207
      %p209 = scmp.eq.s32.totalorder %s33, 0
      %p210 = por %p208, %p209
      %p211 = scmp.le.s32.totalorder 1, %s27
      %p212 = scmp.lt.s32.totalorder %s27, 3
      %p213 = pnand %p211, %p212
      %p214 = pneg %p213
      // Predicated region
      $region9: #{tpu_custom_call.1} parent=5 // pred_check
        _
      $region10: #{tpu_custom_call.1} parent=5 // pred_check_branch
        %216 = sbr.rel (%p213) target = $region12
      $region11: #{tpu_custom_call.1} parent=5 // pred_region
        %s217 = ssub.s32 %s27, 1
      $region12: #{tpu_custom_call.1} parent=5 // pred_fallthru
        _
      %p218 = scmp.lt.s32.totalorder %s27, 2
      // Predicated region
      $region13: #{tpu_custom_call.1} parent=5 // pred_check
        %p219 = pneg %p218
      $region14: #{tpu_custom_call.1} parent=5 // pred_check_branch
        %221 = sbr.rel (%p219) target = $region16
      $region15: #{tpu_custom_call.1} parent=5 // pred_region
        // Predicated region
        $region17: #{tpu_custom_call.1} parent=15 // pred_check
          %p222 = pneg %p61
        $region18: #{tpu_custom_call.1} parent=15 // pred_check_branch
          %224 = sbr.rel (%p222) target = $region20
        $region19: #{tpu_custom_call.1} parent=15 // pred_region
          %s225 = sand.u32 %s51, 1
          %s226 = scalar_lea.sflag [#allocation3], %s225
          %s227 = sand.u32 %s51, 1
          %s228 = smul.addr %s227, 8
          %s229 = scalar_lea.vmem [#allocation2], %s228
          %s230 = sadd.s32 %s34, %s35
          %232 = vsyncadd %s226, 0
          %s233 = smul.addr %s230, 8
          %s234 = scalar_lea.hbm %s0, %s233
          %s236 = sshll.u32 %s234, 4
          %s237 = int_to_ptr.hbm [resolvable:$true] %s236
          %s238 = sshll.u32 %s229, 4
          %s239 = int_to_ptr.vmem [resolvable:$true] %s238
          %241 = dma.hbm_to_vmem [thread:$0]  %s237, 128, %s239, %s226
        $region20: #{tpu_custom_call.1} parent=15 // pred_fallthru
          _
        // Predicated region
        $region21: #{tpu_custom_call.1} parent=15 // pred_check
          %p242 = pneg %p89
        $region22: #{tpu_custom_call.1} parent=15 // pred_check_branch
          %244 = sbr.rel (%p242) target = $region24
        $region23: #{tpu_custom_call.1} parent=15 // pred_region
          %s245 = sand.u32 %s27, 1
          %s246 = scalar_lea.sflag [#allocation6], %s245
          %s247 = sand.u32 %s79, 1
          %s248 = smul.addr %s247, 8
          %s249 = scalar_lea.vmem [#allocation5], %s248
          %s250 = sadd.s32 %s34, %s35
          %252 = vsyncadd %s246, 0
          %s253 = smul.addr %s250, 8
          %s254 = scalar_lea.hbm %s1, %s253
          %s256 = sshll.u32 %s254, 4
          %s257 = int_to_ptr.hbm [resolvable:$true] %s256
          %s258 = sshll.u32 %s249, 4
          %s259 = int_to_ptr.vmem [resolvable:$true] %s258
          %261 = dma.hbm_to_vmem [thread:$0]  %s257, 128, %s259, %s246
        $region24: #{tpu_custom_call.1} parent=15 // pred_fallthru
          _
        // Predicated region
        $region25: #{tpu_custom_call.1} parent=15 // pred_check
          %p262 = pneg %p117
        $region26: #{tpu_custom_call.1} parent=15 // pred_check_branch
          %264 = sbr.rel (%p262) target = $region28
        $region27: #{tpu_custom_call.1} parent=15 // pred_region
          %s265 = sand.u32 %s27, 1
          %s266 = scalar_lea.sflag [#allocation6], %s265
          %s267 = sand.u32 %s107, 1
          %s268 = smul.addr %s267, 8
          %s269 = scalar_lea.vmem [#allocation7], %s268
          %s270 = sadd.s32 %s34, %s35
          %272 = vsyncadd %s266, 0
          %s273 = smul.addr %s270, 8
          %s274 = scalar_lea.hbm %s2, %s273
          %s276 = sshll.u32 %s274, 4
          %s277 = int_to_ptr.hbm [resolvable:$true] %s276
          %s278 = sshll.u32 %s269, 4
          %s279 = int_to_ptr.vmem [resolvable:$true] %s278
          %281 = dma.hbm_to_vmem [thread:$0]  %s277, 128, %s279, %s266
        $region28: #{tpu_custom_call.1} parent=15 // pred_fallthru
          _
        // Predicated region
        $region29: #{tpu_custom_call.1} parent=15 // pred_check
          %p282 = pneg %p145
        $region30: #{tpu_custom_call.1} parent=15 // pred_check_branch
          %284 = sbr.rel (%p282) target = $region32
        $region31: #{tpu_custom_call.1} parent=15 // pred_region
          %s285 = sand.u32 %s135, 1
          %s286 = scalar_lea.sflag [#allocation9], %s285
          %s287 = sand.u32 %s135, 1
          %s288 = smul.addr %s287, 8
          %s289 = scalar_lea.vmem [#allocation8], %s288
          %s290 = sadd.s32 %s34, %s35
          %292 = vsyncadd %s286, 0
          %s293 = smul.addr %s290, 8
          %s294 = scalar_lea.hbm %s3, %s293
          %s296 = sshll.u32 %s294, 4
          %s297 = int_to_ptr.hbm [resolvable:$true] %s296
          %s298 = sshll.u32 %s289, 4
          %s299 = int_to_ptr.vmem [resolvable:$true] %s298
          %301 = dma.hbm_to_vmem [thread:$0]  %s297, 128, %s299, %s286
        $region32: #{tpu_custom_call.1} parent=15 // pred_fallthru
          _
      $region16: #{tpu_custom_call.1} parent=5 // pred_fallthru
        _
      %p302 = scmp.le.s32.totalorder 1, %s27
      %p303 = scmp.lt.s32.totalorder %s27, 3
      %p304 = pnand %p302, %p303
      %p305 = pneg %p304
      // Predicated region
      $region33: #{tpu_custom_call.1} parent=5 // pred_check
        _
      $region34: #{tpu_custom_call.1} parent=5 // pred_check_branch
        %307 = sbr.rel (%p304) target = $region36
      $region35: #{tpu_custom_call.1} parent=5 // pred_region
        %s308 = ssub.s32 %s27, 1
        %s309 = sand.u32 %s54, 1
        %s310 = scalar_lea.sflag [#allocation3], %s309
        %s311 = sand.u32 %s54, 1
        %s312 = smul.addr %s311, 8
        %s313 = scalar_lea.vmem [#allocation2], %s312
        // Predicated region
        $region37: #{tpu_custom_call.1} parent=35 // pred_check
          %p314 = pneg %p67
        $region38: #{tpu_custom_call.1} parent=35 // pred_check_branch
          %316 = sbr.rel (%p314) target = $region40
        $region39: #{tpu_custom_call.1} parent=35 // pred_region
          %318 = dma.done %s310, 128
        $region40: #{tpu_custom_call.1} parent=35 // pred_fallthru
          _
        %s319 = sand.u32 %s32, 1
        %s320 = scalar_lea.sflag [#allocation6], %s319
        %s321 = sand.u32 %s82, 1
        %s322 = smul.addr %s321, 8
        %s323 = scalar_lea.vmem [#allocation5], %s322
        // Predicated region
        $region41: #{tpu_custom_call.1} parent=35 // pred_check
          %p324 = pneg %p95
        $region42: #{tpu_custom_call.1} parent=35 // pred_check_branch
          %326 = sbr.rel (%p324) target = $region44
        $region43: #{tpu_custom_call.1} parent=35 // pred_region
          %328 = dma.done %s320, 128
        $region44: #{tpu_custom_call.1} parent=35 // pred_fallthru
          _
        %s329 = sand.u32 %s32, 1
        %s330 = scalar_lea.sflag [#allocation6], %s329
        %s331 = sand.u32 %s110, 1
        %s332 = smul.addr %s331, 8
        %s333 = scalar_lea.vmem [#allocation7], %s332
        // Predicated region
        $region45: #{tpu_custom_call.1} parent=35 // pred_check
          %p334 = pneg %p123
        $region46: #{tpu_custom_call.1} parent=35 // pred_check_branch
          %336 = sbr.rel (%p334) target = $region48
        $region47: #{tpu_custom_call.1} parent=35 // pred_region
          %338 = dma.done %s330, 128
        $region48: #{tpu_custom_call.1} parent=35 // pred_fallthru
          _
        %s339 = sand.u32 %s138, 1
        %s340 = scalar_lea.sflag [#allocation9], %s339
        %s341 = sand.u32 %s138, 1
        %s342 = smul.addr %s341, 8
        %s343 = scalar_lea.vmem [#allocation8], %s342
        // Predicated region
        $region49: #{tpu_custom_call.1} parent=35 // pred_check
          %p344 = pneg %p151
        $region50: #{tpu_custom_call.1} parent=35 // pred_check_branch
          %346 = sbr.rel (%p344) target = $region52
        $region51: #{tpu_custom_call.1} parent=35 // pred_region
          %348 = dma.done %s340, 128
        $region52: #{tpu_custom_call.1} parent=35 // pred_fallthru
          _
        %s349 = sand.u32 %s54, 1
        %s350 = scalar_lea.sflag [#allocation3], %s349
        %s351 = sand.u32 %s54, 1
        %s352 = smul.addr %s351, 8
        %s353 = scalar_lea.vmem [#allocation2], %s352
        %p354 = pneg %p67
        %p355 = pneg %p64
        %s356 = sand.u32 %s32, 1
        %s357 = scalar_lea.sflag [#allocation6], %s356
        %s358 = sand.u32 %s82, 1
        %s359 = smul.addr %s358, 8
        %s360 = scalar_lea.vmem [#allocation5], %s359
        %p361 = pneg %p95
        %p362 = pneg %p92
        %s363 = sand.u32 %s32, 1
        %s364 = scalar_lea.sflag [#allocation6], %s363
        %s365 = sand.u32 %s110, 1
        %s366 = smul.addr %s365, 8
        %s367 = scalar_lea.vmem [#allocation7], %s366
        %p368 = pneg %p123
        %p369 = pneg %p120
        %s370 = sand.u32 %s138, 1
        %s371 = scalar_lea.sflag [#allocation9], %s370
        %s372 = sand.u32 %s138, 1
        %s373 = smul.addr %s372, 8
        %s374 = scalar_lea.vmem [#allocation8], %s373
        %p375 = pneg %p151
        %p376 = pneg %p148
        %p377 = pneg %p177
        %p378 = pneg %p174
        %s379 = sand.u32 %s164, 1
        %s380 = scalar_lea.sflag [#allocation4], %s379
        %s381 = sand.u32 %s164, 1
        %s382 = smul.addr %s381, 8
        %s383 = scalar_lea.vmem [#allocation10], %s382
        %p384 = pneg %p203
        %p385 = pneg %p200
        %s386 = sand.u32 %s190, 1
        %s387 = scalar_lea.sflag [#allocation12], %s386
        %s388 = sand.u32 %s190, 1
        %s389 = smul.addr %s388, 8
        %s390 = scalar_lea.vmem [#allocation11], %s389
        %s391 = sadd.s32 %s36, %s37
        %s392 = sadd.s32 %s36, %s37
        %s393 = sadd.s32 %s36, %s37
        %s394 = sadd.s32 %s36, %s37
        %p395 = scmp.eq.s32.totalorder %s37, 0
        // Predicated region
        $region53: #{tpu_custom_call.1} parent=35 // pred_check
          %p396 = pneg %p395
        $region54: #{tpu_custom_call.1} parent=35 // pred_check_branch
          %398 = sbr.rel (%p396) target = $region56
        $region55: #{tpu_custom_call.1} parent=35 // pred_region
          %399 = vst [vmem:[%s383] sm:$0xff] 0.0
          %400 = vst [vmem:[%s390] sm:$0xff] 0.0
        $region56: #{tpu_custom_call.1} parent=35 // pred_fallthru
          _
        %v401 = vld [vmem:[%s313] sm:$0xff]
        %v402 = vld [vmem:[%s323] sm:$0xff]
        %v403 = vsub.f32 %v401, %v402
        %v404 = vand.u32 2147483647, %v403
        %v405 = vld [vmem:[%s343] sm:$0xff]
        %v406 = vld [vmem:[%s383] sm:$0xff]
        %v407 = vmul.f32 %v404, %v405
        %v408 = vld [vmem:[%s333] sm:$0xff]
        %v409 = vrcp.pop %v408
        %v410 = vmul.f32 %v408, %v409
        %v411 = vsub.f32 1.0, %v410
        %v412 = vmul.f32 %v409, %v411
        %v413 = vadd.f32 %v409, %v412
        %vm414 = vweird.f32 %v408
        %vm415 = vweird.f32 %v409
        %vm416 = vmor %vm414, %vm415
        %v417 = vsel %vm416, %v409, %v413
        %v418 = vand.u32 2147483647, %v408
        %vm419 = vcmp.eq.f32.partialorder %v418, 8.507059e+37
        %v420 = vand.u32 %v408, 2147483648
        %v421 = vor.u32 1.1754944e-38, %v420
        %v422 = vsel %vm419, %v421, %v417
        %v423 = vmul.f32 %v407, %v422
        %v424 = vadd.f32 %v406, %v423
        %425 = vst [vmem:[%s383] sm:$0xff] %v424
        %v426 = vld [vmem:[%s390] sm:$0xff]
        %v427 = vadd.f32 %v426, %v405
        %428 = vst [vmem:[%s390] sm:$0xff] %v427
        %s429 = sand.u32 %s164, 1
        %s430 = scalar_lea.sflag [#allocation4], %s429
        %s431 = sand.u32 %s164, 1
        %s432 = smul.addr %s431, 8
        %s433 = scalar_lea.vmem [#allocation10], %s432
        %s434 = sand.u32 %s190, 1
        %s435 = scalar_lea.sflag [#allocation12], %s434
        %s436 = sand.u32 %s190, 1
        %s437 = smul.addr %s436, 8
        %s438 = scalar_lea.vmem [#allocation11], %s437
        // Predicated region
        $region57: #{tpu_custom_call.1} parent=35 // pred_check
          %p439 = pneg %p174
        $region58: #{tpu_custom_call.1} parent=35 // pred_check_branch
          %441 = sbr.rel (%p439) target = $region60
        $region59: #{tpu_custom_call.1} parent=35 // pred_region
          %443 = vsyncadd %s430, 0
          %s444 = smul.addr %s36, 8
          %s445 = scalar_lea.hbm %s4, %s444
          %s447 = sshll.u32 %s433, 4
          %s448 = int_to_ptr.vmem [resolvable:$true] %s447
          %s449 = sshll.u32 %s445, 4
          %s450 = int_to_ptr.hbm [resolvable:$true] %s449
          %452 = dma.vmem_to_hbm [thread:$0]  %s448, 128, %s450, %s430
        $region60: #{tpu_custom_call.1} parent=35 // pred_fallthru
          _
        // Predicated region
        $region61: #{tpu_custom_call.1} parent=35 // pred_check
          %p453 = pneg %p200
        $region62: #{tpu_custom_call.1} parent=35 // pred_check_branch
          %455 = sbr.rel (%p453) target = $region64
        $region63: #{tpu_custom_call.1} parent=35 // pred_region
          %457 = vsyncadd %s435, 0
          %s458 = smul.addr %s36, 8
          %s459 = scalar_lea.hbm %s5, %s458
          %s461 = sshll.u32 %s438, 4
          %s462 = int_to_ptr.vmem [resolvable:$true] %s461
          %s463 = sshll.u32 %s459, 4
          %s464 = int_to_ptr.hbm [resolvable:$true] %s463
          %466 = dma.vmem_to_hbm [thread:$0]  %s462, 128, %s464, %s435
        $region64: #{tpu_custom_call.1} parent=35 // pred_fallthru
          _
      $region36: #{tpu_custom_call.1} parent=5 // pred_fallthru
        _
      %p467 = scmp.le.s32.totalorder 2, %s27
      // Predicated region
      $region65: #{tpu_custom_call.1} parent=5 // pred_check
        %p468 = pneg %p467
      $region66: #{tpu_custom_call.1} parent=5 // pred_check_branch
        %470 = sbr.rel (%p468) target = $region68
      $region67: #{tpu_custom_call.1} parent=5 // pred_region
        %s471 = ssub.s32 %s27, 2
        // Predicated region
        $region69: #{tpu_custom_call.1} parent=67 // pred_check
          %p472 = pneg %p180
        $region70: #{tpu_custom_call.1} parent=67 // pred_check_branch
          %474 = sbr.rel (%p472) target = $region72
        $region71: #{tpu_custom_call.1} parent=67 // pred_region
          %s475 = sand.u32 %s165, 1
          %s476 = scalar_lea.sflag [#allocation4], %s475
          %s477 = sand.u32 %s165, 1
          %s478 = smul.addr %s477, 8
          %s479 = scalar_lea.vmem [#allocation10], %s478
          %481 = dma.done %s476, 128
        $region72: #{tpu_custom_call.1} parent=67 // pred_fallthru
          _
        // Predicated region
        $region73: #{tpu_custom_call.1} parent=67 // pred_check
          %p482 = pneg %p206
        $region74: #{tpu_custom_call.1} parent=67 // pred_check_branch
          %484 = sbr.rel (%p482) target = $region76
        $region75: #{tpu_custom_call.1} parent=67 // pred_region
          %s485 = sand.u32 %s191, 1
          %s486 = scalar_lea.sflag [#allocation12], %s485
          %s487 = sand.u32 %s191, 1
          %s488 = smul.addr %s487, 8
          %s489 = scalar_lea.vmem [#allocation11], %s488
          %491 = dma.done %s486, 128
        $region76: #{tpu_custom_call.1} parent=67 // pred_fallthru
          _
      $region68: #{tpu_custom_call.1} parent=5 // pred_fallthru
        _
    $region6: #{tpu_custom_call.1} parent=1 // loop_footer
      %s31 = sadd.s32 1, %s27
    $region7: #{tpu_custom_call.1} parent=1 // loop_footer_branch
      %26 = sbr.rel target = $region3
    $region8: #{tpu_custom_call.1} parent=1 // loop_exit
      _
    %492 = vsyncpa [#allocation3], 1
    %s493 = scalar_lea.sflag [#allocation3], 1
    %494 = vsyncpa %s493, 1
    %495 = vsyncpa [#allocation6], 1
    %s496 = scalar_lea.sflag [#allocation6], 1
    %497 = vsyncpa %s496, 1
    %498 = vsyncpa [#allocation9], 1
    %s499 = scalar_lea.sflag [#allocation9], 1
    %500 = vsyncpa %s499, 1
    %501 = vsyncpa [#allocation4], 1
    %s502 = scalar_lea.sflag [#allocation4], 1
    %503 = vsyncpa %s502, 1
    %504 = vsyncpa [#allocation12], 1
    %s505 = scalar_lea.sflag [#allocation12], 1
    %506 = vsyncpa %s505, 1

</llo_original>
